<compile_context>
chip_gen: v7x
topology: tpu7x:2x2x1
jax: 0.10.0
libtpu: 0.0.40
codegen_flags: <defaults>
</compile_context>

<pallas_src>
import functools
import math
from typing import NamedTuple, Optional

import numpy as np
import jax
import jax.numpy as jnp
from jax import lax
from jax.experimental import pallas as pl
from jax.experimental.pallas import tpu as pltpu


# ---------------------------------------------------------------------------
# Kernels
# ---------------------------------------------------------------------------

def _linear_kernel(x_ref, wT_ref, b_ref, o_ref):
    """Single-K-block path: out = x @ wT + b (f32 MXU accumulation).

    x is cast to the weight's (compute) dtype in-register -- no separate HBM
    cast pass over x.
    """
    acc = jnp.dot(x_ref[...].astype(wT_ref.dtype), wT_ref[...],
                  preferred_element_type=jnp.float32)
    o_ref[...] = (acc + b_ref[...]).astype(o_ref.dtype)


def _linear_kernel_ksplit(x_ref, wT_ref, b_ref, o_ref, acc_ref, *, k_valid, tk):
    """K-tiled path: accumulate partial products in an f32 VMEM scratch.

    The accumulator is initialised with the (broadcast) bias at k == 0, so the
    finalize step is a plain cast+store.  A ragged K tail is masked in-kernel
    (both x columns and weight rows) so stale boundary-block contents can
    never poison the accumulation.
    """
    k = pl.program_id(2)

    @pl.when(k == 0)
    def _():
        acc_ref[...] = jnp.broadcast_to(b_ref[...], acc_ref.shape)

    x = x_ref[...]
    w = wT_ref[...]
    if k_valid % tk != 0:                        # static: only emitted if ragged K
        limit = k_valid - k * tk                 # valid rows/cols in this K block
        cols = lax.broadcasted_iota(jnp.int32, x.shape, 1)
        x = jnp.where(cols < limit, x, jnp.zeros_like(x))
        rows = lax.broadcasted_iota(jnp.int32, w.shape, 0)
        w = jnp.where(rows < limit, w, jnp.zeros_like(w))

    acc_ref[...] += jnp.dot(x.astype(wT_ref.dtype), w,
                            preferred_element_type=jnp.float32)

    @pl.when(k == pl.num_programs(2) - 1)
    def _():
        o_ref[...] = acc_ref[...].astype(o_ref.dtype)


# ---------------------------------------------------------------------------
# Generation-aware VMEM budget & tiling heuristics
# ---------------------------------------------------------------------------

_TM_CAP = 2048                    # rows; HBM-roofline plateau is well below this
_TARGET_PARALLEL_STEPS = 8        # >= 4 steps per TensorCore on v7x (2 TC/chip)
_MIN_TM_WHEN_SPLITTING = 256      # never shrink M tile below this just for steps


def _round_up(v, m):
    return ((v + m - 1) // m) * m


@functools.lru_cache(maxsize=None)
def _vmem_capacity_bytes():
    """Physical per-TensorCore VMEM (128 MiB v5e/v6e, 64 MiB v7x)."""
    try:
        info = pltpu.get_tpu_info()
        for attr in ("vmem_capacity_bytes", "vmem_size_bytes", "vmem_bytes"):
            v = getattr(info, attr, None)
            if v:
                return int(v)
    except Exception:
        pass
    return 64 * 1024 * 1024       # conservative fallback (v7x per-TC physical)


@functools.lru_cache(maxsize=None)
def _vmem_budget_and_limit():
    cap = _vmem_capacity_bytes()
    limit = min(int(cap * 0.85), 100 * 1024 * 1024)
    budget = max(min(int(cap * 0.55), limit - (4 << 20)), 8 << 20)
    return budget, limit


def _choose_tiles(M, K, N_pad, *, x_bytes, w_bytes, out_bytes):
    """Pick (tm, tn, tk, ksplit) from a generation-aware, dtype-aware VMEM
    budget.  Single-K with whole padded N is strongly preferred (weight/bias
    become grid-invariant and accumulation stays inside one dot)."""
    budget, _ = _vmem_budget_and_limit()

    def tm_for(tn, tk, ksplit):
        fixed = 2 * tk * tn * w_bytes + 2 * tn * 4          # weight + bias buffers
        per_row = 2 * tk * x_bytes + 2 * tn * out_bytes      # x + out, double-buffered
        if ksplit:
            per_row += tn * 4                                # f32 accumulator scratch
        if fixed >= budget:
            return 0
        return (budget - fixed) // per_row

    def finalize(tm, tn, tk, ksplit):
        tm = int(min(tm, _TM_CAP))
        if tm >= M:
            tm = M                                    # == full dim: always legal
        else:
            tm = max(8, (tm // 8) * 8)                # ragged last block is legal
        grid_n = -(-N_pad // tn)
        steps = grid_n * -(-M // tm)
        if steps < _TARGET_PARALLEL_STEPS:
            needed_gm = -(-_TARGET_PARALLEL_STEPS // grid_n)
            tm_alt = _round_up(-(-M // needed_gm), 8)
            if _MIN_TM_WHEN_SPLITTING <= tm_alt < tm:
                tm = tm_alt
        return int(tm), int(tn), int(tk), bool(ksplit)

    accept_tm = min(M, 256)

    # Preferred: single-K block (accumulation inside one dot), whole padded N
    # (weight/bias grid-invariant -> DMA'd once).  Shrink tn only if needed.
    tn_candidates = [N_pad] + [t for t in (512, 256, 128) if t < N_pad]
    for tn in tn_candidates:
        tm = tm_for(tn, K, ksplit=False)
        if tm >= accept_tm:
            return finalize(tm, tn, K, False)

    # Fallback: K-split with an f32 VMEM accumulator (huge in_features only).
    tn = min(N_pad, 512)
    best = None
    for tk in (2048, 1024, 512, 256, 128):
        if tk >= K:
            continue
        tm = tm_for(tn, tk, ksplit=True)
        if tm >= accept_tm:
            return finalize(tm, tn, tk, True)
        if best is None or tm > best[0]:
            best = (tm, tk)
    tm, tk = best if best is not None else (8, 128)
    return finalize(max(tm, 8), tn, tk, True)


# ---------------------------------------------------------------------------
# pallas_call wrapper
# ---------------------------------------------------------------------------

@functools.partial(
    jax.jit,
    static_argnames=("n_valid", "out_dtype", "tm", "tn", "tk", "ksplit",
                     "single_buffer"))
def _shared_linear_2d(x2d, weight_t, bias, *, n_valid, out_dtype,
                      tm, tn, tk, ksplit, single_buffer):
    M, K = x2d.shape
    K_w, N_pad = weight_t.shape
    assert K == K_w, "weight_t must be (in_features, padded_out_features)"
    assert bias.shape == (1, N_pad)

    grid_m = pl.cdiv(M, tm)
    grid_n = pl.cdiv(N_pad, tn)
    _, vmem_limit = _vmem_budget_and_limit()

    def param_spec(shape, index_map, invariant):
        # Grid-invariant parameter blocks never get re-fetched; double
        # buffering them only wastes VMEM -> single-buffer when supported.
        if single_buffer and invariant:
            return pl.BlockSpec(shape, index_map, pipeline_mode=pl.Buffered(1))
        return pl.BlockSpec(shape, index_map)

    if not ksplit:
        grid = (grid_m, grid_n)
        in_specs = [
            pl.BlockSpec((tm, K), lambda i, j: (i, 0)),
            param_spec((K, tn), lambda i, j: (0, j), invariant=(grid_n == 1)),
            param_spec((1, tn), lambda i, j: (0, j), invariant=(grid_n == 1)),
        ]
        out_specs = pl.BlockSpec((tm, tn), lambda i, j: (i, j))
        kernel = _linear_kernel
        scratch_shapes = ()
        semantics = ("parallel", "parallel")
    else:
        grid_k = pl.cdiv(K, tk)
        grid = (grid_m, grid_n, grid_k)
        in_specs = [
            pl.BlockSpec((tm, tk), lambda i, j, k: (i, k)),
            pl.BlockSpec((tk, tn), lambda i, j, k: (k, j)),
            pl.BlockSpec((1, tn), lambda i, j, k: (0, j)),
        ]
        out_specs = pl.BlockSpec((tm, tn), lambda i, j, k: (i, j))
        kernel = functools.partial(_linear_kernel_ksplit, k_valid=K, tk=tk)
        scratch_shapes = (pltpu.VMEM((tm, tn), jnp.float32),)
        semantics = ("parallel", "parallel", "arbitrary")

    out_padded = pl.pallas_call(
        kernel,
        out_shape=jax.ShapeDtypeStruct((M, N_pad), out_dtype),
        grid_spec=pltpu.PrefetchScalarGridSpec(
            num_scalar_prefetch=0,
            grid=grid,
            in_specs=in_specs,
            out_specs=out_specs,
            scratch_shapes=scratch_shapes,
        ),
        compiler_params=pltpu.CompilerParams(
            dimension_semantics=semantics,
            vmem_limit_bytes=int(vmem_limit),
        ),
    )(x2d, weight_t, bias)

    if n_valid != N_pad:
        out_padded = out_padded[:, :n_valid]
    return out_padded


@functools.lru_cache(maxsize=None)
def _single_buffer_supported():
    """One-time, memoized capability probe for pl.Buffered(1).  Uses the real
    kernel/spec structure at a tiny size, so jax builds that reject
    buffer_count=1 fall back once instead of paying a failing compile per call."""
    try:
        x = jnp.zeros((16, 8), jnp.float32)
        w = jnp.zeros((8, 128), jnp.bfloat16)
        b = jnp.zeros((1, 128), jnp.float32)
        out = _shared_linear_2d(
            x, w, b, n_valid=128, out_dtype=np.dtype(jnp.float32),
            tm=8, tn=128, tk=8, ksplit=False, single_buffer=True)
        jax.block_until_ready(out)
        return True
    except Exception:
        return False


# ---------------------------------------------------------------------------
# Parameter setup (one-time) and forward pass
# ---------------------------------------------------------------------------

class SharedLinearParams(NamedTuple):
    weight_t: jax.Array        # (in_features, out_features_padded), compute dtype
    bias: jax.Array            # (1, out_features_padded), float32
    in_features: int
    out_features: int


def prepare_shared_linear_params(weight, bias=None, *, compute_dtype=jnp.bfloat16):
    """Hoist all per-call parameter prep to setup time.

    weight : (out_features, in_features)  -- PyTorch layout.
    bias   : (out_features,) or None.
    Returns weight pre-transposed to (in_features, N_pad) in `compute_dtype`
    (the MXU operand dtype) with out_features zero-padded to a multiple of 128
    (lane-dense output stores), plus a (1, N_pad) f32 bias.
    """
    weight = jnp.asarray(weight)
    out_features, in_features = weight.shape
    n_pad = _round_up(out_features, 128)
    w_t = weight.T.astype(compute_dtype)
    if n_pad != out_features:
        w_t = jnp.pad(w_t, ((0, 0), (0, n_pad - out_features)))
    if bias is None:
        b = jnp.zeros((1, n_pad), jnp.float32)
    else:
        b = jnp.asarray(bias).astype(jnp.float32).reshape(1, out_features)
        if n_pad != out_features:
            b = jnp.pad(b, ((0, 0), (0, n_pad - out_features)))
    return SharedLinearParams(weight_t=w_t, bias=b,
                              in_features=int(in_features),
                              out_features=int(out_features))


def shared_linear(x, params: SharedLinearParams, *, out_dtype=None):
    """Forward pass of SharedLinear.

    x : (M, in_features) or (num_networks, points, in_features).
    The weight's stored dtype (from prepare_shared_linear_params) is the MXU
    compute dtype; x is cast to it inside the kernel, accumulation is f32.
    """
    K, N = params.in_features, params.out_features
    has_network_dim = x.ndim == 3
    x2d = x.reshape(-1, K) if has_network_dim else x
    if out_dtype is None:
        out_dtype = x2d.dtype
    out_dtype = np.dtype(out_dtype)

    M = x2d.shape[0]
    N_pad = params.weight_t.shape[1]
    tm, tn, tk, ksplit = _choose_tiles(
        M, K, N_pad,
        x_bytes=x2d.dtype.itemsize,
        w_bytes=params.weight_t.dtype.itemsize,
        out_bytes=out_dtype.itemsize)

    out2d = _shared_linear_2d(
        x2d, params.weight_t, params.bias,
        n_valid=N, out_dtype=out_dtype,
        tm=tm, tn=tn, tk=tk, ksplit=ksplit,
        single_buffer=_single_buffer_supported())

    if has_network_dim:
        return out2d.reshape(x.shape[0], -1, N)
    return out2d


# ---------------------------------------------------------------------------
# Parameter init (matches SharedLinear.reset_parameters defaults)
# ---------------------------------------------------------------------------

def init_shared_linear_params(key, in_features, out_features):
    """kaiming_uniform_(a=sqrt(5), leaky_relu) weight + 'standard' bias init."""
    kw, kb = jax.random.split(key)
    a = math.sqrt(5.0)
    gain = math.sqrt(2.0 / (1.0 + a * a))          # leaky_relu gain
    fan_in = in_features
    w_bound = gain * math.sqrt(3.0 / fan_in)       # kaiming_uniform bound
    weight = jax.random.uniform(
        kw, (out_features, in_features), jnp.float32, -w_bound, w_bound)
    b_bound = 1.0 / math.sqrt(fan_in)
    bias = jax.random.uniform(
        kb, (out_features,), jnp.float32, -b_bound, b_bound)
    return weight, bias


if __name__ == "__main__":
    key = jax.random.PRNGKey(0)
    k_x, k_p = jax.random.split(key)

    num_networks, points, in_features, out_features = 2, 64, 32, 32
    weight, bias = init_shared_linear_params(k_p, in_features, out_features)

    # One-time parameter prep (transpose + compute-dtype cast + lane padding).
    params_bf16 = prepare_shared_linear_params(weight, bias)
    params_f32 = prepare_shared_linear_params(weight, bias,
                                              compute_dtype=jnp.float32)

    # --- 3-D input path (has_network_dim == True), like the PyTorch module ---
    x = jax.random.normal(k_x, (num_networks, points, in_features), jnp.float32)
    out = jax.block_until_ready(shared_linear(x, params_bf16))
    assert out.shape == (num_networks, points, out_features)

    ref = (x.reshape(-1, in_features) @ weight.T + bias).reshape(
        num_networks, -1, out_features)
    assert jnp.allclose(out, ref, atol=2e-2, rtol=2e-2)      # bf16 operands

    out_f32 = jax.block_until_ready(shared_linear(x, params_f32))
    assert jnp.allclose(out_f32, ref, atol=1e-5, rtol=1e-5)  # f32 compute path

    # bf16 output path (halves store traffic for fused MLP stacks).
    out_bf16 = jax.block_until_ready(
        shared_linear(x, params_bf16, out_dtype=jnp.bfloat16))
    assert out_bf16.dtype == jnp.bfloat16
    assert jnp.allclose(out_bf16.astype(jnp.float32), ref, atol=3e-2, rtol=3e-2)

    # --- 2-D input with ragged M (no wrapper padding; Pallas clips blocks) ---
    k2 = jax.random.PRNGKey(1)
    kx2, kp2 = jax.random.split(k2)
    w2, b2 = init_shared_linear_params(kp2, 256, 64)
    p2 = prepare_shared_linear_params(w2, b2)
    x2 = jax.random.normal(kx2, (100, 256), jnp.float32)
    out2 = jax.block_until_ready(shared_linear(x2, p2))
    ref2 = x2 @ w2.T + b2
    assert out2.shape == (100, 64)
    assert jnp.allclose(out2, ref2, atol=3e-2, rtol=3e-2)

    # --- K-split accumulator path, forced via tk < K (ragged M too) ----------
    out3 = jax.block_until_ready(_shared_linear_2d(
        x2, p2.weight_t, p2.bias, n_valid=64, out_dtype=np.dtype(jnp.float32),
        tm=56, tn=128, tk=128, ksplit=True,
        single_buffer=_single_buffer_supported()))
    assert out3.shape == (100, 64)
    assert jnp.allclose(out3, ref2, atol=3e-2, rtol=3e-2)

    # --- K-split with a ragged K tail (exercises in-kernel K masking) --------
    k3 = jax.random.PRNGKey(2)
    kx3, kp3 = jax.random.split(k3)
    w3, b3 = init_shared_linear_params(kp3, 200, 48)
    p3 = prepare_shared_linear_params(w3, b3)
    x3 = jax.random.normal(kx3, (64, 200), jnp.float32)
    out4 = jax.block_until_ready(_shared_linear_2d(
        x3, p3.weight_t, p3.bias, n_valid=48, out_dtype=np.dtype(jnp.float32),
        tm=64, tn=128, tk=128, ksplit=True,
        single_buffer=_single_buffer_supported()))
    ref3 = x3 @ w3.T + b3
    assert out4.shape == (64, 48)
    assert jnp.allclose(out4, ref3, atol=3e-2, rtol=3e-2)

    print("KERNEL_OK")
</pallas_src>

<mosaic_0001>
module attributes {stable_mosaic.version = 11 : i64} {
  func.func @_linear_kernel(%arg0: i32, %arg1: i32, %arg2: memref<8x8xf32, #tpu.memory_space<vmem>>, %arg3: memref<8x128xbf16, #tpu.memory_space<vmem>>, %arg4: memref<1x128xf32, #tpu.memory_space<vmem>>, %arg5: memref<8x128xf32, #tpu.memory_space<vmem>>) attributes {dimension_semantics = [#tpu.dimension_semantics<parallel>, #tpu.dimension_semantics<parallel>], iteration_bounds = array<i64: 2, 1>, scalar_prefetch = 0 : i64, scratch_operands = 0 : i64, tpu.core_type = #tpu.core_type<tc>, window_params = [{transform_indices = @transform_0, window_bounds = array<i64: 8, 8>}, {pipeline_mode = #tpu.pipeline_mode<synchronous>, transform_indices = @transform_1, window_bounds = array<i64: 8, 128>}, {pipeline_mode = #tpu.pipeline_mode<synchronous>, transform_indices = @transform_2, window_bounds = array<i64: 1, 128>}, {transform_indices = @transform_3, window_bounds = array<i64: 8, 128>}]} {
    %c0 = arith.constant 0 : index
    %c0_0 = arith.constant 0 : index
    %0 = vector.load %arg2[%c0, %c0_0] : memref<8x8xf32, #tpu.memory_space<vmem>>, vector<8x8xf32>
    %1 = arith.truncf %0 : vector<8x8xf32> to vector<8x8xbf16>
    %c0_1 = arith.constant 0 : index
    %c0_2 = arith.constant 0 : index
    %2 = vector.load %arg3[%c0_1, %c0_2] : memref<8x128xbf16, #tpu.memory_space<vmem>>, vector<8x128xbf16>
    %cst = arith.constant dense<0.000000e+00> : vector<8x128xf32>
    %3 = tpu.matmul %1, %2, %cst {dimension_numbers = #tpu.dot_dimension_numbers<[1], [0], [0], [1], [0, 0, 1, 1], [], []>} : vector<8x8xbf16>, vector<8x128xbf16>, vector<8x128xf32> -> vector<8x128xf32>
    %c0_3 = arith.constant 0 : index
    %c0_4 = arith.constant 0 : index
    %4 = vector.load %arg4[%c0_3, %c0_4] : memref<1x128xf32, #tpu.memory_space<vmem>>, vector<1x128xf32>
    %5 = vector.broadcast %4 : vector<1x128xf32> to vector<8x128xf32>
    %6 = arith.addf %3, %5 : vector<8x128xf32>
    %c0_5 = arith.constant 0 : index
    %c0_6 = arith.constant 0 : index
    %7 = vector.load %arg5[%c0_5, %c0_6] : memref<8x128xf32, #tpu.memory_space<vmem>>, vector<8x128xf32>
    tpu.vector_store %arg5[%c0_5, %c0_6], %6 {strides = array<i32>} : memref<8x128xf32, #tpu.memory_space<vmem>>, vector<8x128xf32>,
    return
  }
  func.func @transform_0(%arg0: i32, %arg1: i32) -> (i32, i32) {
    %c0_i32 = arith.constant 0 : i32
    %c0_i32_0 = arith.constant 0 : i32
    return %arg0, %c0_i32 : i32, i32
  }
  func.func @transform_1(%arg0: i32, %arg1: i32) -> (i32, i32) {
    %c0_i32 = arith.constant 0 : i32
    %c0_i32_0 = arith.constant 0 : i32
    return %c0_i32, %arg1 : i32, i32
  }
  func.func @transform_2(%arg0: i32, %arg1: i32) -> (i32, i32) {
    %c0_i32 = arith.constant 0 : i32
    %c0_i32_0 = arith.constant 0 : i32
    return %c0_i32, %arg1 : i32, i32
  }
  func.func @transform_3(%arg0: i32, %arg1: i32) -> (i32, i32) {
    %c0_i32 = arith.constant 0 : i32
    return %arg0, %arg1 : i32, i32
  }
}

module attributes {stable_mosaic.version = 11 : i64} {
  func.func @_linear_kernel(%arg0: i32, %arg1: i32, %arg2: memref<128x32xf32, #tpu.memory_space<vmem>>, %arg3: memref<32x128xbf16, #tpu.memory_space<vmem>>, %arg4: memref<1x128xf32, #tpu.memory_space<vmem>>, %arg5: memref<128x128xf32, #tpu.memory_space<vmem>>) attributes {dimension_semantics = [#tpu.dimension_semantics<parallel>, #tpu.dimension_semantics<parallel>], iteration_bounds = array<i64: 1, 1>, scalar_prefetch = 0 : i64, scratch_operands = 0 : i64, tpu.core_type = #tpu.core_type<tc>, window_params = [{transform_indices = @transform_0, window_bounds = array<i64: 128, 32>}, {transform_indices = @transform_1, window_bounds = array<i64: 32, 128>}, {transform_indices = @transform_2, window_bounds = array<i64: 1, 128>}, {transform_indices = @transform_3, window_bounds = array<i64: 128, 128>}]} {
    %c0 = arith.constant 0 : index
    %c0_0 = arith.constant 0 : index
    %0 = vector.load %arg2[%c0, %c0_0] : memref<128x32xf32, #tpu.memory_space<vmem>>, vector<128x32xf32>
    %1 = arith.truncf %0 : vector<128x32xf32> to vector<128x32xbf16>
    %c0_1 = arith.constant 0 : index
    %c0_2 = arith.constant 0 : index
    %2 = vector.load %arg3[%c0_1, %c0_2] : memref<32x128xbf16, #tpu.memory_space<vmem>>, vector<32x128xbf16>
    %cst = arith.constant dense<0.000000e+00> : vector<128x128xf32>
    %3 = tpu.matmul %1, %2, %cst {dimension_numbers = #tpu.dot_dimension_numbers<[1], [0], [0], [1], [0, 0, 1, 1], [], []>} : vector<128x32xbf16>, vector<32x128xbf16>, vector<128x128xf32> -> vector<128x128xf32>
    %c0_3 = arith.constant 0 : index
    %c0_4 = arith.constant 0 : index
    %4 = vector.load %arg4[%c0_3, %c0_4] : memref<1x128xf32, #tpu.memory_space<vmem>>, vector<1x128xf32>
    %5 = vector.broadcast %4 : vector<1x128xf32> to vector<128x128xf32>
    %6 = arith.addf %3, %5 : vector<128x128xf32>
    %c0_5 = arith.constant 0 : index
    %c0_6 = arith.constant 0 : index
    %7 = vector.load %arg5[%c0_5, %c0_6] : memref<128x128xf32, #tpu.memory_space<vmem>>, vector<128x128xf32>
    tpu.vector_store %arg5[%c0_5, %c0_6], %6 {strides = array<i32>} : memref<128x128xf32, #tpu.memory_space<vmem>>, vector<128x128xf32>,
    return
  }
  func.func @transform_0(%arg0: i32, %arg1: i32) -> (i32, i32) {
    %c0_i32 = arith.constant 0 : i32
    %c0_i32_0 = arith.constant 0 : i32
    return %arg0, %c0_i32 : i32, i32
  }
  func.func @transform_1(%arg0: i32, %arg1: i32) -> (i32, i32) {
    %c0_i32 = arith.constant 0 : i32
    %c0_i32_0 = arith.constant 0 : i32
    return %c0_i32, %arg1 : i32, i32
  }
  func.func @transform_2(%arg0: i32, %arg1: i32) -> (i32, i32) {
    %c0_i32 = arith.constant 0 : i32
    %c0_i32_0 = arith.constant 0 : i32
    return %c0_i32, %arg1 : i32, i32
  }
  func.func @transform_3(%arg0: i32, %arg1: i32) -> (i32, i32) {
    %c0_i32 = arith.constant 0 : i32
    return %arg0, %arg1 : i32, i32
  }
}

</mosaic_0001>

<llo_original>
// kernel: _shared_linear_2d.1
$region0: #{_shared_linear_2d.1}
  #allocation0 [shape = 'u32[]', space=smem, size = 0x4, offset = 0x4, fixed_abs, tag = 'smem constant byte address 0x4 - core index']
  #allocation1 [shape = 'u32[144,128]{1,0:T(1,128)}', space=vmem, size = 0x12000, scoped, tag = 'internal scratch']
  %s0 = inlined_call_operand.vmem [shape: f32[16,8], index: 0, kind: input, shape index: {}]
  %s1 = inlined_call_operand.vmem [shape: bf16[8,128], index: 1, kind: input, shape index: {}]
  %s2 = inlined_call_operand.vmem [shape: f32[1,128], index: 2, kind: input, shape index: {}]
  %s3 = inlined_call_operand.hbm [shape: f32[16,128], index: 3, kind: output, shape index: {}]
  %s4 = sld [smem:[#allocation0]]
  $region45: #{_shared_linear_2d.1} parent=0
    _
  %s6 = ssub.s32 1, %s4
  %s7 = scalar_select 0, %s6, %s4
  $region1: #{_shared_linear_2d.1} parent=0
    #allocation2 [shape = 'u8[8192]{0}', space=vmem, size = 0x2000, scoped, tag = 'output window, operand 0']
    #allocation3 [shape = 's32[2]{0}', space=sflag, size = 0x8, scoped, tag = 'scoped memory for _shared_linear_2d.1']
    %8 = vsyncpa [#allocation3], 0
    %s9 = scalar_lea.sflag [#allocation3], 1
    %10 = vsyncpa %s9, 0
    loop: start=0, step=1, limit=4
    $region2: #{_shared_linear_2d.1} parent=1 // loop_pre_header
      _
    $region3: #{_shared_linear_2d.1} parent=1 // loop_header
      %s12 = sphi 0, %s16
      %p13 = scmp.ge.s32.totalorder %s12, 4
      %s19 = sphi 0, %s31
      %s20 = sphi 0, %s27
      %s21 = sphi 0, %s19
      %s22 = sphi 0, %s20
      %s23 = sphi 0, %s21
      %s24 = sphi 0, %s22
      %s34 = sphi 0, %s36
      %s37 = sphi 0, %s34
      %s38 = sphi 0, %s37
      %s54 = sphi 0, %s38
      %s60 = sphi 0, %s62
      %s63 = sphi 0, %s60
      %s64 = sphi 0, %s63
      %s80 = sphi 0, %s64
      %s86 = sphi 0, %s88
      %s89 = sphi 0, %s86
      %s90 = sphi 0, %s89
      %s106 = sphi 0, %s90
      %s114 = sphi 0, %s116
      %s117 = sphi 0, %s114
      %s118 = sphi 0, %s117
      %s134 = sphi 0, %s118
    $region4: #{_shared_linear_2d.1} parent=1 // loop_header_branch
      %15 = sbr.rel (%p13) target = $region8
    $region5: #{_shared_linear_2d.1} parent=1 // loop_body
      %s17 = ssub.s32 %s12, 1
      %s18 = ssub.s32 %s12, 2
      %s25 = sadd.s32 1, %s20
      %p26 = scmp.ge.s32.totalorder %s25, 1
      %s27 = scalar_select %p26, 0, %s25
      %s28 = sadd.s32 1, %s19
      %s29 = scalar_select %p26, %s28, %s19
      %p30 = scmp.ge.s32.totalorder %s29, 2
      %s31 = scalar_select %p30, 0, %s29
      %s32 = ssub.s32 %s19, %s31
      %p33 = scmp.eq.s32.totalorder %s32, 0
      %s35 = sadd.s32 %s34, 1
      %s36 = scalar_select %p33, %s34, %s35
      %p39 = pneg %p33
      %p40 = scmp.eq.s32.totalorder %s12, 1
      %p41 = por %p39, %p40
      %p42 = scmp.ne.s32.totalorder %s34, %s37
      %p43 = scmp.eq.s32.totalorder %s12, 0
      %p44 = por %p42, %p43
      %p45 = scmp.ne.s32.totalorder %s34, %s37
      %p46 = scmp.eq.s32.totalorder %s17, 1
      %p47 = por %p45, %p46
      %p48 = scmp.ne.s32.totalorder %s37, %s38
      %p49 = scmp.eq.s32.totalorder %s17, 0
      %p50 = por %p48, %p49
      %p51 = scmp.ne.s32.totalorder %s37, %s38
      %p52 = scmp.eq.s32.totalorder %s18, 1
      %p53 = por %p51, %p52
      %p55 = scmp.ne.s32.totalorder %s38, %s54
      %p56 = scmp.eq.s32.totalorder %s18, 0
      %p57 = por %p55, %p56
      %s58 = ssub.s32 %s20, %s27
      %p59 = scmp.eq.s32.totalorder %s58, 0
      %s61 = sadd.s32 %s60, 1
      %s62 = scalar_select %p59, %s60, %s61
      %p65 = pneg %p59
      %p66 = scmp.eq.s32.totalorder %s12, 1
      %p67 = por %p65, %p66
      %p68 = scmp.ne.s32.totalorder %s60, %s63
      %p69 = scmp.eq.s32.totalorder %s12, 0
      %p70 = por %p68, %p69
      %p71 = scmp.ne.s32.totalorder %s60, %s63
      %p72 = scmp.eq.s32.totalorder %s17, 1
      %p73 = por %p71, %p72
      %p74 = scmp.ne.s32.totalorder %s63, %s64
      %p75 = scmp.eq.s32.totalorder %s17, 0
      %p76 = por %p74, %p75
      %p77 = scmp.ne.s32.totalorder %s63, %s64
      %p78 = scmp.eq.s32.totalorder %s18, 1
      %p79 = por %p77, %p78
      %p81 = scmp.ne.s32.totalorder %s64, %s80
      %p82 = scmp.eq.s32.totalorder %s18, 0
      %p83 = por %p81, %p82
      %s84 = ssub.s32 %s20, %s27
      %p85 = scmp.eq.s32.totalorder %s84, 0
      %s87 = sadd.s32 %s86, 1
      %s88 = scalar_select %p85, %s86, %s87
      %p91 = pneg %p85
      %p92 = scmp.eq.s32.totalorder %s12, 1
      %p93 = por %p91, %p92
      %p94 = scmp.ne.s32.totalorder %s86, %s89
      %p95 = scmp.eq.s32.totalorder %s12, 0
      %p96 = por %p94, %p95
      %p97 = scmp.ne.s32.totalorder %s86, %s89
      %p98 = scmp.eq.s32.totalorder %s17, 1
      %p99 = por %p97, %p98
      %p100 = scmp.ne.s32.totalorder %s89, %s90
      %p101 = scmp.eq.s32.totalorder %s17, 0
      %p102 = por %p100, %p101
      %p103 = scmp.ne.s32.totalorder %s89, %s90
      %p104 = scmp.eq.s32.totalorder %s18, 1
      %p105 = por %p103, %p104
      %p107 = scmp.ne.s32.totalorder %s90, %s106
      %p108 = scmp.eq.s32.totalorder %s18, 0
      %p109 = por %p107, %p108
      %s110 = ssub.s32 %s19, %s31
      %s111 = ssub.s32 %s20, %s27
      %s112 = sor.u32 %s110, %s111
      %p113 = scmp.eq.s32.totalorder %s112, 0
      %s115 = sadd.s32 %s114, 1
      %s116 = scalar_select %p113, %s114, %s115
      %p119 = pneg %p113
      %p120 = scmp.eq.s32.totalorder %s12, 1
      %p121 = por %p119, %p120
      %p122 = scmp.ne.s32.totalorder %s114, %s117
      %p123 = scmp.eq.s32.totalorder %s12, 0
      %p124 = por %p122, %p123
      %p125 = scmp.ne.s32.totalorder %s114, %s117
      %p126 = scmp.eq.s32.totalorder %s17, 1
      %p127 = por %p125, %p126
      %p128 = scmp.ne.s32.totalorder %s117, %s118
      %p129 = scmp.eq.s32.totalorder %s17, 0
      %p130 = por %p128, %p129
      %p131 = scmp.ne.s32.totalorder %s117, %s118
      %p132 = scmp.eq.s32.totalorder %s18, 1
      %p133 = por %p131, %p132
      %p135 = scmp.ne.s32.totalorder %s118, %s134
      %p136 = scmp.eq.s32.totalorder %s18, 0
      %p137 = por %p135, %p136
      %p138 = scmp.le.s32.totalorder 1, %s12
      %p139 = scmp.lt.s32.totalorder %s12, 3
      %p140 = pnand %p138, %p139
      %p141 = pneg %p140
      // Predicated region
      $region9: #{_shared_linear_2d.1} parent=5 // pred_check
        _
      $region10: #{_shared_linear_2d.1} parent=5 // pred_check_branch
        %143 = sbr.rel (%p140) target = $region12
      $region11: #{_shared_linear_2d.1} parent=5 // pred_region
        %s144 = ssub.s32 %s12, 1
        // Predicated region
        $region13: #{_shared_linear_2d.1} parent=11 // pred_check
          %p145 = pneg %p76
        $region14: #{_shared_linear_2d.1} parent=11 // pred_check_branch
          %147 = sbr.rel (%p145) target = $region16
        $region15: #{_shared_linear_2d.1} parent=11 // pred_region
          %p148 = scmp.lt.s32.totalorder %s22, 0
          %s149 = scalar_select %p148, %s22, 0
          %s150 = smul.addr %s149, 4
          %s151 = scalar_lea.vmem %s1, %s150
        $region16: #{_shared_linear_2d.1} parent=11 // pred_fallthru
          _
        // Predicated region
        $region17: #{_shared_linear_2d.1} parent=11 // pred_check
          %p152 = pneg %p102
        $region18: #{_shared_linear_2d.1} parent=11 // pred_check_branch
          %154 = sbr.rel (%p152) target = $region20
        $region19: #{_shared_linear_2d.1} parent=11 // pred_region
          %p155 = scmp.lt.s32.totalorder %s22, 0
          %s156 = scalar_select %p155, %s22, 0
          %s157 = scalar_lea.vmem %s2, %s156
        $region20: #{_shared_linear_2d.1} parent=11 // pred_fallthru
          _
      $region12: #{_shared_linear_2d.1} parent=5 // pred_fallthru
        _
      %p158 = scmp.lt.s32.totalorder %s12, 2
      // Predicated region
      $region21: #{_shared_linear_2d.1} parent=5 // pred_check
        %p159 = pneg %p158
      $region22: #{_shared_linear_2d.1} parent=5 // pred_check_branch
        %161 = sbr.rel (%p159) target = $region24
      $region23: #{_shared_linear_2d.1} parent=5 // pred_region
        // Predicated region
        $region25: #{_shared_linear_2d.1} parent=23 // pred_check
          %p162 = pneg %p44
        $region26: #{_shared_linear_2d.1} parent=23 // pred_check_branch
          %164 = sbr.rel (%p162) target = $region28
        $region27: #{_shared_linear_2d.1} parent=23 // pred_region
          %p165 = scmp.lt.s32.totalorder %s19, 1
          %s166 = scalar_select %p165, %s19, 1
          %s167 = smul.addr %s166, 8
          %s168 = scalar_lea.vmem %s0, %s167
        $region28: #{_shared_linear_2d.1} parent=23 // pred_fallthru
          _
      $region24: #{_shared_linear_2d.1} parent=5 // pred_fallthru
        _
      %p169 = scmp.le.s32.totalorder 1, %s12
      %p170 = scmp.lt.s32.totalorder %s12, 3
      %p171 = pnand %p169, %p170
      %p172 = pneg %p171
      // Predicated region
      $region29: #{_shared_linear_2d.1} parent=5 // pred_check
        _
      $region30: #{_shared_linear_2d.1} parent=5 // pred_check_branch
        %174 = sbr.rel (%p171) target = $region32
      $region31: #{_shared_linear_2d.1} parent=5 // pred_region
        %s175 = ssub.s32 %s12, 1
        %p176 = scmp.lt.s32.totalorder %s21, 1
        %s177 = scalar_select %p176, %s21, 1
        %s178 = smul.addr %s177, 8
        %s179 = scalar_lea.vmem %s0, %s178
        %p180 = pneg %p50
        %p181 = pneg %p47
        %p182 = scmp.lt.s32.totalorder %s22, 0
        %s183 = scalar_select %p182, %s22, 0
        %s184 = smul.addr %s183, 4
        %s185 = scalar_lea.vmem %s1, %s184
        %p186 = pneg %p76
        %p187 = pneg %p73
        %p188 = scmp.lt.s32.totalorder %s22, 0
        %s189 = scalar_select %p188, %s22, 0
        %s190 = scalar_lea.vmem %s2, %s189
        %p191 = pneg %p102
        %p192 = pneg %p99
        %p193 = pneg %p130
        %p194 = pneg %p127
        %s195 = sand.u32 %s117, 1
        %s196 = scalar_lea.sflag [#allocation3], %s195
        %s197 = sand.u32 %s117, 1
        %s198 = smul.addr %s197, 8
        %s199 = scalar_lea.vmem [#allocation2], %s198
        %p200 = scmp.lt.s32.totalorder %s21, 1
        %s201 = scalar_select %p200, %s21, 1
        %s202 = smul.addr %s201, 8
        %s203 = scalar_lea.vmem %s0, %s202
        %p204 = scmp.lt.s32.totalorder %s22, 0
        %s205 = scalar_select %p204, %s22, 0
        %s206 = smul.addr %s205, 4
        %s207 = scalar_lea.vmem %s1, %s206
        %p208 = scmp.lt.s32.totalorder %s22, 0
        %s209 = scalar_select %p208, %s22, 0
        %s210 = scalar_lea.vmem %s2, %s209
        %v212 = vld [vmem:[%s203] sm:$0xff]
        %v213 = vpack.c.bf16 %v212, %v212
        %v214 = vld [vmem:[%s207] sm:$0xf]
        %v215 = vld [vmem:[%s210] sm:$0x1]
        %v217 = vlaneseq
        %v218 = vshrl.u32 %v217, 7
        %v219 = vsub.s32 0, %v218
        %v220 = vrot.slane %v215, %v219
        %vm222 = vcmask 64512
        %v224 = vsel %vm222, %v213, 0
        %vm226 = vcmask 1043456
        %v228 = vsel %vm226, %v214, 0
        %230 = vmatprep.subr.bf16.mxu0 0
        %231 = vmatpush1.bf16.msra.mxu0 %v228
        %232 = vmatprep.subr.bf16.mxu0 0
        %233 = vmatpush1.bf16.msra.mxu0 0
        %234 = vmatprep.subr.bf16.mxu0 0
        %235 = vmatpush1.bf16.msra.mxu0 0
        %236 = vmatprep.subr.bf16.mxu0 0
        %237 = vmatpush1.bf16.msra.mxu0 0
        %238 = vmatprep.subr.bf16.mxu0 0
        %239 = vmatpush1.bf16.msra.mxu0 0
        %240 = vmatprep.subr.bf16.mxu0 0
        %241 = vmatpush1.bf16.msra.mxu0 0
        %242 = vmatprep.subr.bf16.mxu0 0
        %243 = vmatpush1.bf16.msra.mxu0 0
        %244 = vmatprep.subr.bf16.mxu0 0
        %245 = vmatpush1.bf16.msra.mxu0 0
        %246 = vmatprep.subr.bf16.mxu0 0
        %247 = vmatpush1.bf16.msra.mxu0 0
        %248 = vmatprep.subr.bf16.mxu0 0
        %249 = vmatpush1.bf16.msra.mxu0 0
        %250 = vmatprep.subr.bf16.mxu0 0
        %251 = vmatpush1.bf16.msra.mxu0 0
        %252 = vmatprep.subr.bf16.mxu0 0
        %253 = vmatpush1.bf16.msra.mxu0 0
        %254 = vmatprep.subr.bf16.mxu0 0
        %255 = vmatpush1.bf16.msra.mxu0 0
        %256 = vmatprep.subr.bf16.mxu0 0
        %257 = vmatpush1.bf16.msra.mxu0 0
        %258 = vmatprep.subr.bf16.mxu0 0
        %259 = vmatpush1.bf16.msra.mxu0 0
        %260 = vmatprep.subr.bf16.mxu0 0
        %261 = vmatpush1.bf16.msra.mxu0 0
        %262 = vmatprep.mubr.bf16.mxu0 0
        %263 = vmatmul.mubr.bf16.gmra.mrb[0].mxu0 %v224
        %v264 = vpop.f32.mrb[0].mxu0
        %v265 = vadd.f32 %v220, %v264
        %v266 = vpop.f32.mrb[0].mxu0
        %v267 = vpop.f32.mrb[0].mxu0
        %v268 = vpop.f32.mrb[0].mxu0
        %269 = vdwg.mxu0
        %270 = vst [vmem:[%s199] sm:$0xff] %v265
        %s271 = sand.u32 %s117, 1
        %s272 = scalar_lea.sflag [#allocation3], %s271
        %s273 = sand.u32 %s117, 1
        %s274 = smul.addr %s273, 8
        %s275 = scalar_lea.vmem [#allocation2], %s274
        // Predicated region
        $region33: #{_shared_linear_2d.1} parent=31 // pred_check
          %p276 = pneg %p127
        $region34: #{_shared_linear_2d.1} parent=31 // pred_check_branch
          %278 = sbr.rel (%p276) target = $region36
        $region35: #{_shared_linear_2d.1} parent=31 // pred_region
          %s280 = ssub.s32 128, 128
          %281 = vsyncadd %s272, %s280
          %s282 = sadd.s32 %s22, %s21
          %s283 = smul.addr %s282, 128
          %s284 = scalar_lea.hbm %s3, %s283
          %s286 = sshll.u32 %s275, 4
          %s287 = int_to_ptr.vmem [resolvable:$true] %s286
          %289 = dma.vmem_to_hbm [thread:$0]  %s287, 128, %s284, %s272
        $region36: #{_shared_linear_2d.1} parent=31 // pred_fallthru
          _
      $region32: #{_shared_linear_2d.1} parent=5 // pred_fallthru
        _
      %p290 = scmp.le.s32.totalorder 2, %s12
      // Predicated region
      $region37: #{_shared_linear_2d.1} parent=5 // pred_check
        %p291 = pneg %p290
      $region38: #{_shared_linear_2d.1} parent=5 // pred_check_branch
        %293 = sbr.rel (%p291) target = $region40
      $region39: #{_shared_linear_2d.1} parent=5 // pred_region
        %s294 = ssub.s32 %s12, 2
        // Predicated region
        $region41: #{_shared_linear_2d.1} parent=39 // pred_check
          %p295 = pneg %p133
        $region42: #{_shared_linear_2d.1} parent=39 // pred_check_branch
          %297 = sbr.rel (%p295) target = $region44
        $region43: #{_shared_linear_2d.1} parent=39 // pred_region
          %s298 = sand.u32 %s118, 1
          %s299 = scalar_lea.sflag [#allocation3], %s298
          %s300 = sand.u32 %s118, 1
          %s301 = smul.addr %s300, 8
          %s302 = scalar_lea.vmem [#allocation2], %s301
          %303 = dma.done %s299, 128
        $region44: #{_shared_linear_2d.1} parent=39 // pred_fallthru
          _
      $region40: #{_shared_linear_2d.1} parent=5 // pred_fallthru
        _
    $region6: #{_shared_linear_2d.1} parent=1 // loop_footer
      %s16 = sadd.s32 1, %s12
    $region7: #{_shared_linear_2d.1} parent=1 // loop_footer_branch
      %11 = sbr.rel target = $region3
    $region8: #{_shared_linear_2d.1} parent=1 // loop_exit
      _
    %304 = vsyncpa [#allocation3], 1
    %s305 = scalar_lea.sflag [#allocation3], 1
    %306 = vsyncpa %s305, 1

// kernel: _shared_linear_2d.1
$region0: #{_shared_linear_2d.1}
  #allocation0 [shape = 'u32[]', space=smem, size = 0x4, offset = 0x4, fixed_abs, tag = 'smem constant byte address 0x4 - core index']
  #allocation1 [shape = 'u32[144,128]{1,0:T(1,128)}', space=vmem, size = 0x12000, scoped, tag = 'internal scratch']
  %s0 = inlined_call_operand.vmem [shape: f32[128,32], index: 0, kind: input, shape index: {}]
  %s1 = inlined_call_operand.vmem [shape: bf16[32,128], index: 1, kind: input, shape index: {}]
  %s2 = inlined_call_operand.vmem [shape: f32[1,128], index: 2, kind: input, shape index: {}]
  %s3 = inlined_call_operand.vmem [shape: f32[128,128], index: 3, kind: output, shape index: {}]
  %s4 = sld [smem:[#allocation0]]
  $region22: #{_shared_linear_2d.1} parent=0
    _
  %s6 = ssub.s32 1, %s4
  %s7 = scalar_select 0, %s6, %s4
  // Predicated region
  $region2: #{_shared_linear_2d.1} parent=0 // pred_check
    _
  $region3: #{_shared_linear_2d.1} parent=0 // pred_check_branch
    %9 = sbr.rel (0) target = $region5
  $region4: #{_shared_linear_2d.1} parent=0 // pred_region
    _
  $region5: #{_shared_linear_2d.1} parent=0 // pred_fallthru
    _
  // Predicated region
  $region6: #{_shared_linear_2d.1} parent=0 // pred_check
    _
  $region7: #{_shared_linear_2d.1} parent=0 // pred_check_branch
    %11 = sbr.rel (0) target = $region9
  $region8: #{_shared_linear_2d.1} parent=0 // pred_region
    _
  $region9: #{_shared_linear_2d.1} parent=0 // pred_fallthru
    _
  // Predicated region
  $region10: #{_shared_linear_2d.1} parent=0 // pred_check
    _
  $region11: #{_shared_linear_2d.1} parent=0 // pred_check_branch
    %13 = sbr.rel (0) target = $region13
  $region12: #{_shared_linear_2d.1} parent=0 // pred_region
    _
  $region13: #{_shared_linear_2d.1} parent=0 // pred_fallthru
    _
  %v15 = vld [vmem:[%s0] sm:$0xff]
  %v16 = vld [vmem:[%s0 + $0x8] sm:$0xff]
  %v17 = vld [vmem:[%s0 + $0x10] sm:$0xff]
  %v18 = vld [vmem:[%s0 + $0x18] sm:$0xff]
  %v19 = vld [vmem:[%s0 + $0x20] sm:$0xff]
  %v20 = vld [vmem:[%s0 + $0x28] sm:$0xff]
  %v21 = vld [vmem:[%s0 + $0x30] sm:$0xff]
  %v22 = vld [vmem:[%s0 + $0x38] sm:$0xff]
  %v23 = vld [vmem:[%s0 + $0x40] sm:$0xff]
  %v24 = vld [vmem:[%s0 + $0x48] sm:$0xff]
  %v25 = vld [vmem:[%s0 + $0x50] sm:$0xff]
  %v26 = vld [vmem:[%s0 + $0x58] sm:$0xff]
  %v27 = vld [vmem:[%s0 + $0x60] sm:$0xff]
  %v28 = vld [vmem:[%s0 + $0x68] sm:$0xff]
  %v29 = vld [vmem:[%s0 + $0x70] sm:$0xff]
  %v30 = vld [vmem:[%s0 + $0x78] sm:$0xff]
  %v31 = vpack.c.bf16 %v16, %v15
  %v32 = vpack.c.bf16 %v18, %v17
  %v33 = vpack.c.bf16 %v20, %v19
  %v34 = vpack.c.bf16 %v22, %v21
  %v35 = vpack.c.bf16 %v24, %v23
  %v36 = vpack.c.bf16 %v26, %v25
  %v37 = vpack.c.bf16 %v28, %v27
  %v38 = vpack.c.bf16 %v30, %v29
  %v39 = vld [vmem:[%s1] sm:$0xf]
  %v40 = vld [vmem:[%s1 + $0x4] sm:$0xf]
  %v41 = vld [vmem:[%s1 + $0x8] sm:$0xf]
  %v42 = vld [vmem:[%s1 + $0xc] sm:$0xf]
  %v43 = vld [vmem:[%s2] sm:$0x1]
  %v45 = vlaneseq
  %v46 = vshrl.u32 %v45, 7
  %v47 = vsub.s32 0, %v46
  %v48 = vrot.slane %v43, %v47
  %v54 = vunpack.c.l.b16 %v39
  %v55 = vunpack.c.l.b16 %v40
  %v56 = vunpack.c.l.b16 %v41
  %v57 = vunpack.c.l.b16 %v42
  %v58 = vpack.c.b16 %v55, %v54
  %v59 = vpack.c.b16 %v57, %v56
  %vm62 = vcmask 261120
  %v64 = vsel %vm62, %v31, 0
  %v67 = vsel %vm62, %v32, 0
  %v70 = vsel %vm62, %v33, 0
  %v73 = vsel %vm62, %v34, 0
  %v76 = vsel %vm62, %v35, 0
  %v79 = vsel %vm62, %v36, 0
  %v82 = vsel %vm62, %v37, 0
  %v85 = vsel %vm62, %v38, 0
  %87 = vmatprep.subr.bf16.mxu0 0
  %88 = vmatpush1.bf16.msra.mxu0 %v58
  %89 = vmatprep.subr.bf16.mxu0 0
  %90 = vmatpush1.bf16.msra.mxu0 %v59
  %91 = vmatprep.subr.bf16.mxu0 0
  %92 = vmatpush1.bf16.msra.mxu0 0
  %93 = vmatprep.subr.bf16.mxu0 0
  %94 = vmatpush1.bf16.msra.mxu0 0
  %95 = vmatprep.subr.bf16.mxu0 0
  %96 = vmatpush1.bf16.msra.mxu0 0
  %97 = vmatprep.subr.bf16.mxu0 0
  %98 = vmatpush1.bf16.msra.mxu0 0
  %99 = vmatprep.subr.bf16.mxu0 0
  %100 = vmatpush1.bf16.msra.mxu0 0
  %101 = vmatprep.subr.bf16.mxu0 0
  %102 = vmatpush1.bf16.msra.mxu0 0
  %103 = vmatprep.subr.bf16.mxu0 0
  %104 = vmatpush1.bf16.msra.mxu0 0
  %105 = vmatprep.subr.bf16.mxu0 0
  %106 = vmatpush1.bf16.msra.mxu0 0
  %107 = vmatprep.subr.bf16.mxu0 0
  %108 = vmatpush1.bf16.msra.mxu0 0
  %109 = vmatprep.subr.bf16.mxu0 0
  %110 = vmatpush1.bf16.msra.mxu0 0
  %111 = vmatprep.subr.bf16.mxu0 0
  %112 = vmatpush1.bf16.msra.mxu0 0
  %113 = vmatprep.subr.bf16.mxu0 0
  %114 = vmatpush1.bf16.msra.mxu0 0
  %115 = vmatprep.subr.bf16.mxu0 0
  %116 = vmatpush1.bf16.msra.mxu0 0
  %117 = vmatprep.subr.bf16.mxu0 0
  %118 = vmatpush1.bf16.msra.mxu0 0
  %119 = vmatprep.mubr.bf16.mxu0 0
  %120 = vmatmul.mubr.bf16.gmra.mrb[0].mxu0 %v64
  %v121 = vpop.f32.mrb[0].mxu0
  %v122 = vadd.f32 %v48, %v121
  %v123 = vpop.f32.mrb[0].mxu0
  %v124 = vpop.f32.mrb[0].mxu0
  %v125 = vadd.f32 %v48, %v124
  %v126 = vpop.f32.mrb[0].mxu0
  %127 = vmatprep.mubr.bf16.mxu0 0
  %128 = vmatmul.mubr.bf16.gmra.mrb[0].mxu0 %v67
  %v129 = vpop.f32.mrb[0].mxu0
  %v130 = vadd.f32 %v48, %v129
  %v131 = vpop.f32.mrb[0].mxu0
  %v132 = vpop.f32.mrb[0].mxu0
  %v133 = vadd.f32 %v48, %v132
  %v134 = vpop.f32.mrb[0].mxu0
  %135 = vmatprep.mubr.bf16.mxu0 0
  %136 = vmatmul.mubr.bf16.gmra.mrb[0].mxu0 %v70
  %v137 = vpop.f32.mrb[0].mxu0
  %v138 = vadd.f32 %v48, %v137
  %v139 = vpop.f32.mrb[0].mxu0
  %v140 = vpop.f32.mrb[0].mxu0
  %v141 = vadd.f32 %v48, %v140
  %v142 = vpop.f32.mrb[0].mxu0
  %143 = vmatprep.mubr.bf16.mxu0 0
  %144 = vmatmul.mubr.bf16.gmra.mrb[0].mxu0 %v73
  %v145 = vpop.f32.mrb[0].mxu0
  %v146 = vadd.f32 %v48, %v145
  %v147 = vpop.f32.mrb[0].mxu0
  %v148 = vpop.f32.mrb[0].mxu0
  %v149 = vadd.f32 %v48, %v148
  %v150 = vpop.f32.mrb[0].mxu0
  %151 = vmatprep.mubr.bf16.mxu0 0
  %152 = vmatmul.mubr.bf16.gmra.mrb[0].mxu0 %v76
  %v153 = vpop.f32.mrb[0].mxu0
  %v154 = vadd.f32 %v48, %v153
  %v155 = vpop.f32.mrb[0].mxu0
  %v156 = vpop.f32.mrb[0].mxu0
  %v157 = vadd.f32 %v48, %v156
  %v158 = vpop.f32.mrb[0].mxu0
  %159 = vmatprep.mubr.bf16.mxu0 0
  %160 = vmatmul.mubr.bf16.gmra.mrb[0].mxu0 %v79
  %v161 = vpop.f32.mrb[0].mxu0
  %v162 = vadd.f32 %v48, %v161
  %v163 = vpop.f32.mrb[0].mxu0
  %v164 = vpop.f32.mrb[0].mxu0
  %v165 = vadd.f32 %v48, %v164
  %v166 = vpop.f32.mrb[0].mxu0
  %167 = vmatprep.mubr.bf16.mxu0 0
  %168 = vmatmul.mubr.bf16.gmra.mrb[0].mxu0 %v82
  %v169 = vpop.f32.mrb[0].mxu0
  %v170 = vadd.f32 %v48, %v169
  %v171 = vpop.f32.mrb[0].mxu0
  %v172 = vpop.f32.mrb[0].mxu0
  %v173 = vadd.f32 %v48, %v172
  %v174 = vpop.f32.mrb[0].mxu0
  %175 = vmatprep.mubr.bf16.mxu0 0
  %176 = vmatmul.mubr.bf16.gmra.mrb[0].mxu0 %v85
  %v177 = vpop.f32.mrb[0].mxu0
  %v178 = vadd.f32 %v48, %v177
  %v179 = vpop.f32.mrb[0].mxu0
  %v180 = vpop.f32.mrb[0].mxu0
  %v181 = vadd.f32 %v48, %v180
  %v182 = vpop.f32.mrb[0].mxu0
  %183 = vdwg.mxu0
  %184 = vst [vmem:[%s3] sm:$0xff] %v122
  %185 = vst [vmem:[%s3 + $0x8] sm:$0xff] %v125
  %186 = vst [vmem:[%s3 + $0x10] sm:$0xff] %v130
  %187 = vst [vmem:[%s3 + $0x18] sm:$0xff] %v133
  %188 = vst [vmem:[%s3 + $0x20] sm:$0xff] %v138
  %189 = vst [vmem:[%s3 + $0x28] sm:$0xff] %v141
  %190 = vst [vmem:[%s3 + $0x30] sm:$0xff] %v146
  %191 = vst [vmem:[%s3 + $0x38] sm:$0xff] %v149
  %192 = vst [vmem:[%s3 + $0x40] sm:$0xff] %v154
  %193 = vst [vmem:[%s3 + $0x48] sm:$0xff] %v157
  %194 = vst [vmem:[%s3 + $0x50] sm:$0xff] %v162
  %195 = vst [vmem:[%s3 + $0x58] sm:$0xff] %v165
  %196 = vst [vmem:[%s3 + $0x60] sm:$0xff] %v170
  %197 = vst [vmem:[%s3 + $0x68] sm:$0xff] %v173
  %198 = vst [vmem:[%s3 + $0x70] sm:$0xff] %v178
  %199 = vst [vmem:[%s3 + $0x78] sm:$0xff] %v181
  // Predicated region
  $region14: #{_shared_linear_2d.1} parent=0 // pred_check
    _
  $region15: #{_shared_linear_2d.1} parent=0 // pred_check_branch
    %201 = sbr.rel (0) target = $region17
  $region16: #{_shared_linear_2d.1} parent=0 // pred_region
    _
  $region17: #{_shared_linear_2d.1} parent=0 // pred_fallthru
    _
  // Predicated region
  $region18: #{_shared_linear_2d.1} parent=0 // pred_check
    _
  $region19: #{_shared_linear_2d.1} parent=0 // pred_check_branch
    %203 = sbr.rel (0) target = $region21
  $region20: #{_shared_linear_2d.1} parent=0 // pred_region
    _
  $region21: #{_shared_linear_2d.1} parent=0 // pred_fallthru
    _

</llo_original>
